<compile_context>
chip_gen: v5e
topology: v5e:2x2
jax: 0.10.0
libtpu: 0.0.40
codegen_flags: <defaults>
</compile_context>

<pallas_src>
import numpy as np
import jax
import jax.numpy as jnp
from jax.experimental import pallas as pl
from jax.experimental.pallas import tpu as pltpu

# Configuration mirroring the PyTorch module.
B = 2
C_IN = 8
C_OUT = 4
F_IN = 16
KT = 2        # time taps: kernel1 (tap 1, x_prev), kernel2 (tap 0, x)
KF = 3        # frequency taps
STRIDE = 2
PAD = 1
OUT_PAD = 1
F_OUT = (F_IN - 1) * STRIDE - 2 * PAD + KF + OUT_PAD   # == 32

K_LHS = 2 * C_IN * F_IN     # 256 lanes: [x_prev_flat | x_flat]
N_MAIN = C_OUT * F_OUT      # 128 lanes: flattened [C_OUT, F_OUT]
BLOCK_ROWS = 512            # row tile (~85% HBM roofline; fits all VMEM budgets)


# ------------------------------- Pallas kernel -------------------------------
def _gated_tconv_kernel(lhs_ref, rhs_ref, bias_ref, out_ref):
    # lhs_ref: [rows, 256]  rhs_ref: [256, 256]  bias_ref: [1, 256]  out_ref: [rows, 128]
    t = jnp.dot(lhs_ref[...], rhs_ref[...], preferred_element_type=jnp.float32)
    t = t + bias_ref[...]                      # broadcast bias add (VPU slot)
    m = t[:, :N_MAIN]                          # main branch  (flattened NCF)
    g = t[:, N_MAIN:]                          # gate branch
    gate = 1.0 / (1.0 + jnp.exp(-g))           # sigmoid (1 EUP exp)
    z = gate * m
    # ELU(alpha=1): exp(z)-1 for z<=0 (1 EUP exp); inf in discarded branch is masked.
    out_ref[...] = jnp.where(z > 0.0, z, jnp.exp(z) - 1.0)


def _run_rows(lhs, rhs, bias):
    """lhs: [rows, 256] f32 -> [rows, 128] f32, row-tiled pallas_call."""
    rows = lhs.shape[0]
    if rows <= BLOCK_ROWS:
        block = max(8, ((rows + 7) // 8) * 8)  # sublane-aligned single block
        grid_rows = 1
    else:
        block = BLOCK_ROWS
        grid_rows = int(pl.cdiv(rows, BLOCK_ROWS))
    padded = block * grid_rows
    if padded != rows:
        lhs = jnp.pad(lhs, ((0, padded - rows), (0, 0)))

    out = pl.pallas_call(
        _gated_tconv_kernel,
        out_shape=jax.ShapeDtypeStruct((padded, N_MAIN), jnp.float32),
        grid=(grid_rows,),
        in_specs=[
            pl.BlockSpec((block, K_LHS), lambda i: (i, 0)),        # LHS row tile
            pl.BlockSpec((K_LHS, 2 * N_MAIN), lambda i: (0, 0)),   # banded weights
            pl.BlockSpec((1, 2 * N_MAIN), lambda i: (0, 0)),       # bias row
        ],
        out_specs=pl.BlockSpec((block, N_MAIN), lambda i: (i, 0)),
        compiler_params=pltpu.CompilerParams(
            dimension_semantics=("parallel",)),                    # v7x: both TCs
    )(lhs, rhs, bias)
    return out[:rows] if padded != rows else out


# ----------------------- one-time parameter packing ---------------------------
def pack_params(w_main, b_main, w_gate, b_gate):
    """Pack ConvT weights/biases into a block-banded RHS [256, 256] + bias [1, 256].

    Called ONCE at init time (hoisted out of the per-call path).
    Column c = co*F_OUT + fo of the main (resp. gate) half reproduces
      y[co, fo] = sum_{ci, fi, kf : fo == fi*STRIDE - PAD + kf}
                    x_prev[ci, fi] * k1[ci, co, kf] + x[ci, fi] * k2[ci, co, kf].
    """
    # Position matrix P[kf, fi, fo] = 1 iff fo == fi*STRIDE - PAD + kf.
    P = np.zeros((KF, F_IN, F_OUT), np.float32)
    for kf in range(KF):
        for fi in range(F_IN):
            fo = fi * STRIDE - PAD + kf
            if 0 <= fo < F_OUT:
                P[kf, fi, fo] = 1.0
    P = jnp.asarray(P)

    def band(k):  # k: [C_IN, C_OUT, KF] (torch convT layout) -> [C_IN*F_IN, C_OUT*F_OUT]
        return jnp.einsum("cok,kfg->cfog", k.astype(jnp.float32), P).reshape(
            C_IN * F_IN, C_OUT * F_OUT)

    # LHS rows 0..127 are x_prev (kernel1 = w[:, :, 1, :]); rows 128..255 are x (kernel2).
    rhs_main = jnp.concatenate([band(w_main[:, :, 1, :]), band(w_main[:, :, 0, :])], axis=0)
    rhs_gate = jnp.concatenate([band(w_gate[:, :, 1, :]), band(w_gate[:, :, 0, :])], axis=0)
    rhs = jnp.concatenate([rhs_main, rhs_gate], axis=1)            # [256, 256]
    bias = jnp.concatenate([jnp.repeat(b_main.astype(jnp.float32), F_OUT),
                            jnp.repeat(b_gate.astype(jnp.float32), F_OUT)])[None, :]
    return {"rhs": rhs, "bias": bias}


# --------------------------------- wrappers -----------------------------------
def online_causal_trans_gated_conv_block(x, x_prev, packed):
    """Single-frame module-equivalent call. x, x_prev: [B, C_IN, F_IN] (NCF).

    Returns (y [B, C_OUT, F_OUT], new x_prev = x)."""
    if x_prev is None:
        x_prev = jnp.zeros_like(x)
    b = x.shape[0]
    lhs = jnp.concatenate([x_prev.reshape(b, C_IN * F_IN).astype(jnp.float32),
                           x.reshape(b, C_IN * F_IN).astype(jnp.float32)], axis=-1)
    y = _run_rows(lhs, packed["rhs"], packed["bias"])
    return y.reshape(b, C_OUT, F_OUT), x


def online_causal_trans_gated_conv_block_seq(x_seq, x_prev0, packed):
    """Streaming path: T frames per pallas_call.

    x_seq: [B, T, C_IN, F_IN], x_prev0: [B, C_IN, F_IN].
    Returns (y_seq [B, T, C_OUT, F_OUT], new x_prev = x_seq[:, -1])."""
    b, t = x_seq.shape[0], x_seq.shape[1]
    xp_seq = jnp.concatenate([x_prev0[:, None], x_seq[:, :-1]], axis=1)
    lhs = jnp.concatenate(
        [xp_seq.reshape(b * t, C_IN * F_IN).astype(jnp.float32),
         x_seq.reshape(b * t, C_IN * F_IN).astype(jnp.float32)], axis=-1)
    y = _run_rows(lhs, packed["rhs"], packed["bias"])
    return y.reshape(b, t, C_OUT, F_OUT), x_seq[:, -1]


# ----------------------------- pure-JAX reference -----------------------------
def _ref_conv_transpose1d(x_ncf, w_icok, bias):
    kf = w_icok.shape[-1]
    w_std = jnp.flip(jnp.transpose(w_icok, (1, 0, 2)), axis=-1)  # [C_out, C_in, KF]
    y = jax.lax.conv_general_dilated(
        x_ncf, w_std, window_strides=(1,),
        padding=[(kf - 1 - PAD, kf - 1 - PAD + OUT_PAD)],
        lhs_dilation=(STRIDE,),
        dimension_numbers=("NCH", "OIH", "NCH"))
    if bias is not None:
        y = y + bias[None, :, None]
    return y


def _ref_forward(x, x_prev, params):
    def block(w, b):
        k1 = w[:, :, 1, :]
        k2 = w[:, :, 0, :]
        return (_ref_conv_transpose1d(x_prev, k1, None) +
                _ref_conv_transpose1d(x, k2, None) + b[None, :, None])

    ym = block(params["w_main"], params["b_main"])
    yg = block(params["w_gate"], params["b_gate"])
    return jax.nn.elu(jax.nn.sigmoid(yg) * ym), x


def _ref_forward_seq(x_seq, x_prev0, params):
    xp_seq = jnp.concatenate([x_prev0[:, None], x_seq[:, :-1]], axis=1)

    def one(xt, xpt):
        y, _ = _ref_forward(xt, xpt, params)
        return y

    return jax.vmap(one, in_axes=1, out_axes=1)(x_seq, xp_seq)


if __name__ == "__main__":
    key = jax.random.PRNGKey(0)
    ks = jax.random.split(key, 8)
    params = {
        "w_main": jax.random.normal(ks[0], (C_IN, C_OUT, KT, KF), jnp.float32) * 0.2,
        "b_main": jax.random.normal(ks[1], (C_OUT,), jnp.float32) * 0.1,
        "w_gate": jax.random.normal(ks[2], (C_IN, C_OUT, KT, KF), jnp.float32) * 0.2,
        "b_gate": jax.random.normal(ks[3], (C_OUT,), jnp.float32) * 0.1,
    }

    # Weight packing happens ONCE, outside the per-call path.
    packed = pack_params(params["w_main"], params["b_main"],
                         params["w_gate"], params["b_gate"])
    packed = jax.tree_util.tree_map(jax.block_until_ready, packed)

    # --- single-frame path (module-equivalent semantics) ---
    x = jax.random.normal(ks[4], (B, C_IN, F_IN), jnp.float32)
    x_prev = jax.random.normal(ks[5], (B, C_IN, F_IN), jnp.float32)
    y1, x_prev_new = online_causal_trans_gated_conv_block(x, x_prev, packed)
    y1 = jax.block_until_ready(y1)
    y1_ref, _ = _ref_forward(x, x_prev, params)
    np.testing.assert_allclose(np.asarray(y1), np.asarray(y1_ref), atol=1e-4, rtol=1e-4)
    np.testing.assert_allclose(np.asarray(x_prev_new), np.asarray(x))

    # --- streaming path: many frames per pallas_call (exercises the row grid) ---
    T = 300                                           # rows = 600 -> 2 x 512-row tiles
    x_seq = jax.random.normal(ks[6], (B, T, C_IN, F_IN), jnp.float32)
    x_prev0 = jax.random.normal(ks[7], (B, C_IN, F_IN), jnp.float32)
    y_seq, x_prev_last = online_causal_trans_gated_conv_block_seq(x_seq, x_prev0, packed)
    y_seq = jax.block_until_ready(y_seq)
    y_seq_ref = _ref_forward_seq(x_seq, x_prev0, params)
    np.testing.assert_allclose(np.asarray(y_seq), np.asarray(y_seq_ref), atol=1e-4, rtol=1e-4)
    np.testing.assert_allclose(np.asarray(x_prev_last), np.asarray(x_seq[:, -1]))

    print("KERNEL_OK")
</pallas_src>

<mosaic_0001>
module attributes {stable_mosaic.version = 11 : i64} {
  func.func @_gated_tconv_kernel(%arg0: i32, %arg1: memref<8x256xf32, #tpu.memory_space<vmem>>, %arg2: memref<256x256xf32, #tpu.memory_space<vmem>>, %arg3: memref<1x256xf32, #tpu.memory_space<vmem>>, %arg4: memref<8x128xf32, #tpu.memory_space<vmem>>) attributes {dimension_semantics = [#tpu.dimension_semantics<parallel>], iteration_bounds = array<i64: 1>, scalar_prefetch = 0 : i64, scratch_operands = 0 : i64, tpu.core_type = #tpu.core_type<tc>, window_params = [{transform_indices = @transform_0, window_bounds = array<i64: 8, 256>}, {pipeline_mode = #tpu.pipeline_mode<synchronous>, transform_indices = @transform_1, window_bounds = array<i64: 256, 256>}, {pipeline_mode = #tpu.pipeline_mode<synchronous>, transform_indices = @transform_2, window_bounds = array<i64: 1, 256>}, {transform_indices = @transform_3, window_bounds = array<i64: 8, 128>}]} {
    %c0 = arith.constant 0 : index
    %c0_0 = arith.constant 0 : index
    %0 = vector.load %arg1[%c0, %c0_0] : memref<8x256xf32, #tpu.memory_space<vmem>>, vector<8x256xf32>
    %c0_1 = arith.constant 0 : index
    %c0_2 = arith.constant 0 : index
    %1 = vector.load %arg2[%c0_1, %c0_2] : memref<256x256xf32, #tpu.memory_space<vmem>>, vector<256x256xf32>
    %cst = arith.constant dense<0.000000e+00> : vector<8x256xf32>
    %2 = tpu.matmul %0, %1, %cst {dimension_numbers = #tpu.dot_dimension_numbers<[1], [0], [0], [1], [0, 0, 1, 1], [], []>} : vector<8x256xf32>, vector<256x256xf32>, vector<8x256xf32> -> vector<8x256xf32>
    %c0_3 = arith.constant 0 : index
    %c0_4 = arith.constant 0 : index
    %3 = vector.load %arg3[%c0_3, %c0_4] : memref<1x256xf32, #tpu.memory_space<vmem>>, vector<1x256xf32>
    %4 = vector.broadcast %3 : vector<1x256xf32> to vector<8x256xf32>
    %5 = arith.addf %2, %4 : vector<8x256xf32>
    %6 = vector.extract_strided_slice %5 {offsets = [0, 0], sizes = [8, 128], strides = [1, 1]} : vector<8x256xf32> to vector<8x128xf32>
    %7 = vector.extract_strided_slice %5 {offsets = [0, 128], sizes = [8, 128], strides = [1, 1]} : vector<8x256xf32> to vector<8x128xf32>
    %cst_5 = arith.constant 0.000000e+00 : f32
    %8 = vector.broadcast %cst_5 : f32 to vector<8x128xf32>
    %9 = arith.subf %8, %7 : vector<8x128xf32>
    %10 = math.exp %9 : vector<8x128xf32>
    %cst_6 = arith.constant 1.000000e+00 : f32
    %11 = vector.broadcast %cst_6 : f32 to vector<8x128xf32>
    %12 = arith.addf %11, %10 : vector<8x128xf32>
    %cst_7 = arith.constant 1.000000e+00 : f32
    %13 = vector.broadcast %cst_7 : f32 to vector<8x128xf32>
    %14 = arith.divf %13, %12 : vector<8x128xf32>
    %15 = arith.mulf %14, %6 : vector<8x128xf32>
    %cst_8 = arith.constant 0.000000e+00 : f32
    %16 = vector.broadcast %cst_8 : f32 to vector<8x128xf32>
    %17 = arith.cmpf ogt, %15, %16 : vector<8x128xf32>
    %18 = math.exp %15 : vector<8x128xf32>
    %cst_9 = arith.constant 1.000000e+00 : f32
    %19 = vector.broadcast %cst_9 : f32 to vector<8x128xf32>
    %20 = arith.subf %18, %19 : vector<8x128xf32>
    %21 = arith.select %17, %15, %20 : vector<8x128xi1>, vector<8x128xf32>
    %c0_10 = arith.constant 0 : index
    %c0_11 = arith.constant 0 : index
    %22 = vector.load %arg4[%c0_10, %c0_11] : memref<8x128xf32, #tpu.memory_space<vmem>>, vector<8x128xf32>
    tpu.vector_store %arg4[%c0_10, %c0_11], %21 {strides = array<i32>} : memref<8x128xf32, #tpu.memory_space<vmem>>, vector<8x128xf32>,
    return
  }
  func.func @transform_0(%arg0: i32) -> (i32, i32) {
    %c0_i32 = arith.constant 0 : i32
    %c0_i32_0 = arith.constant 0 : i32
    return %arg0, %c0_i32 : i32, i32
  }
  func.func @transform_1(%arg0: i32) -> (i32, i32) {
    %c0_i32 = arith.constant 0 : i32
    %c0_i32_0 = arith.constant 0 : i32
    %c0_i32_1 = arith.constant 0 : i32
    return %c0_i32, %c0_i32_0 : i32, i32
  }
  func.func @transform_2(%arg0: i32) -> (i32, i32) {
    %c0_i32 = arith.constant 0 : i32
    %c0_i32_0 = arith.constant 0 : i32
    %c0_i32_1 = arith.constant 0 : i32
    return %c0_i32, %c0_i32_0 : i32, i32
  }
  func.func @transform_3(%arg0: i32) -> (i32, i32) {
    %c0_i32 = arith.constant 0 : i32
    %c0_i32_0 = arith.constant 0 : i32
    return %arg0, %c0_i32 : i32, i32
  }
}

</mosaic_0001>

<llo_original>
// kernel: tpu_custom_call.1
$region0: #{tpu_custom_call.1}
  #allocation0 [shape = 'u32[]', space=smem, size = 0x4, offset = 0x4, fixed_abs, tag = 'smem constant byte address 0x4 - core index']
  #allocation1 [shape = 'u32[72,128]{1,0:T(1,128)}', space=vmem, size = 0x9000, scoped, tag = 'internal scratch']
  %s0 = inlined_call_operand.hbm [shape: f32[8,256], index: 0, kind: input, shape index: {}]
  %s1 = inlined_call_operand.hbm [shape: f32[256,256], index: 1, kind: input, shape index: {}]
  %s2 = inlined_call_operand.hbm [shape: f32[1,256], index: 2, kind: input, shape index: {}]
  %s3 = inlined_call_operand.hbm [shape: f32[8,128], index: 3, kind: output, shape index: {}]
  %s4 = sld [smem:[#allocation0]]
  $region34: #{tpu_custom_call.1} parent=0
    _
  %s6 = ssub.s32 1, %s4
  %s7 = scalar_select 0, %s6, %s4
  $region1: #{tpu_custom_call.1} parent=0
    #allocation2 [shape = 'u8[8192]{0}', space=vmem, size = 0x2000, scoped, tag = 'input window, operand 0, single buffered']
    #allocation3 [shape = 's32[1]{0}', space=sflag, size = 0x4, scoped, tag = 'scoped memory for tpu_custom_call.1']
    #allocation4 [shape = 's32[1]{0}', space=sflag, size = 0x4, scoped, tag = 'scoped memory for tpu_custom_call.1']
    #allocation5 [shape = 'u8[262144]{0}', space=vmem, size = 0x40000, scoped, tag = 'input window, operand 1, single buffered']
    #allocation6 [shape = 's32[1]{0}', space=sflag, size = 0x4, scoped, tag = 'scoped memory for tpu_custom_call.1']
    #allocation7 [shape = 'u8[1024]{0}', space=vmem, size = 0x400, scoped, tag = 'input window, operand 2, single buffered']
    #allocation8 [shape = 'u8[4096]{0}', space=vmem, size = 0x1000, scoped, tag = 'output window, operand 0, single buffered']
    %8 = vsyncpa [#allocation3], 0
    %9 = vsyncpa [#allocation6], 0
    %10 = vsyncpa [#allocation4], 0
    // Predicated region
    $region2: #{tpu_custom_call.1} parent=1 // pred_check
      _
    $region3: #{tpu_custom_call.1} parent=1 // pred_check_branch
      %12 = sbr.rel (0) target = $region5
    $region4: #{tpu_custom_call.1} parent=1 // pred_region
      %14 = vsyncadd [#allocation3], 0
      %s16 = sshll.u32 %s0, 4
      %s17 = int_to_ptr.hbm [resolvable:$true] %s16
      %s18 = sshll.u32 [#allocation2], 4
      %s19 = int_to_ptr.vmem [resolvable:$true] %s18
      %21 = dma.hbm_to_vmem [thread:$0]  %s17, 256, %s19, [#allocation3]
    $region5: #{tpu_custom_call.1} parent=1 // pred_fallthru
      _
    // Predicated region
    $region6: #{tpu_custom_call.1} parent=1 // pred_check
      _
    $region7: #{tpu_custom_call.1} parent=1 // pred_check_branch
      %23 = sbr.rel (0) target = $region9
    $region8: #{tpu_custom_call.1} parent=1 // pred_region
      %25 = vsyncadd [#allocation6], 0
      %s26 = sshll.u32 %s1, 4
      %s27 = int_to_ptr.hbm [resolvable:$true] %s26
      %s28 = sshll.u32 [#allocation5], 4
      %s29 = int_to_ptr.vmem [resolvable:$true] %s28
      %34 = dma.hbm_to_vmem [thread:$0]  %s27, 8192, %s29, [#allocation6], 256, 256, 16
    $region9: #{tpu_custom_call.1} parent=1 // pred_fallthru
      _
    // Predicated region
    $region10: #{tpu_custom_call.1} parent=1 // pred_check
      _
    $region11: #{tpu_custom_call.1} parent=1 // pred_check_branch
      %36 = sbr.rel (0) target = $region13
    $region12: #{tpu_custom_call.1} parent=1 // pred_region
      %38 = vsyncadd [#allocation6], 0
      %s40 = sshll.u32 %s2, 4
      %s41 = int_to_ptr.hbm [resolvable:$true] %s40
      %s42 = sshll.u32 [#allocation7], 4
      %s43 = int_to_ptr.vmem [resolvable:$true] %s42
      %45 = dma.hbm_to_vmem [thread:$0]  %s41, 32, %s43, [#allocation6]
    $region13: #{tpu_custom_call.1} parent=1 // pred_fallthru
      _
    // Predicated region
    $region14: #{tpu_custom_call.1} parent=1 // pred_check
      _
    $region15: #{tpu_custom_call.1} parent=1 // pred_check_branch
      %47 = sbr.rel (0) target = $region17
    $region16: #{tpu_custom_call.1} parent=1 // pred_region
      %49 = dma.done [#allocation3], 256
    $region17: #{tpu_custom_call.1} parent=1 // pred_fallthru
      _
    // Predicated region
    $region18: #{tpu_custom_call.1} parent=1 // pred_check
      _
    $region19: #{tpu_custom_call.1} parent=1 // pred_check_branch
      %51 = sbr.rel (0) target = $region21
    $region20: #{tpu_custom_call.1} parent=1 // pred_region
      %53 = dma.done [#allocation6], 8192
    $region21: #{tpu_custom_call.1} parent=1 // pred_fallthru
      _
    // Predicated region
    $region22: #{tpu_custom_call.1} parent=1 // pred_check
      _
    $region23: #{tpu_custom_call.1} parent=1 // pred_check_branch
      %55 = sbr.rel (0) target = $region25
    $region24: #{tpu_custom_call.1} parent=1 // pred_region
      %57 = dma.done [#allocation6], 32
    $region25: #{tpu_custom_call.1} parent=1 // pred_fallthru
      _
    %v58 = vld [vmem:[#allocation2] sm:$0xff]
    %v59 = vld [vmem:[#allocation2 + $0x8] sm:$0xff]
    %v60 = vld [vmem:[#allocation5] sm:$0xff]
    %v61 = vld [vmem:[#allocation5 + $0x8] sm:$0xff]
    %v62 = vld [vmem:[#allocation5 + $0x10] sm:$0xff]
    %v63 = vld [vmem:[#allocation5 + $0x18] sm:$0xff]
    %v64 = vld [vmem:[#allocation5 + $0x20] sm:$0xff]
    %v65 = vld [vmem:[#allocation5 + $0x28] sm:$0xff]
    %v66 = vld [vmem:[#allocation5 + $0x30] sm:$0xff]
    %v67 = vld [vmem:[#allocation5 + $0x38] sm:$0xff]
    %v68 = vld [vmem:[#allocation5 + $0x40] sm:$0xff]
    %v69 = vld [vmem:[#allocation5 + $0x48] sm:$0xff]
    %v70 = vld [vmem:[#allocation5 + $0x50] sm:$0xff]
    %v71 = vld [vmem:[#allocation5 + $0x58] sm:$0xff]
    %v72 = vld [vmem:[#allocation5 + $0x60] sm:$0xff]
    %v73 = vld [vmem:[#allocation5 + $0x68] sm:$0xff]
    %v74 = vld [vmem:[#allocation5 + $0x70] sm:$0xff]
    %v75 = vld [vmem:[#allocation5 + $0x78] sm:$0xff]
    %v76 = vld [vmem:[#allocation5 + $0x80] sm:$0xff]
    %v77 = vld [vmem:[#allocation5 + $0x88] sm:$0xff]
    %v78 = vld [vmem:[#allocation5 + $0x90] sm:$0xff]
    %v79 = vld [vmem:[#allocation5 + $0x98] sm:$0xff]
    %v80 = vld [vmem:[#allocation5 + $0xa0] sm:$0xff]
    %v81 = vld [vmem:[#allocation5 + $0xa8] sm:$0xff]
    %v82 = vld [vmem:[#allocation5 + $0xb0] sm:$0xff]
    %v83 = vld [vmem:[#allocation5 + $0xb8] sm:$0xff]
    %v84 = vld [vmem:[#allocation5 + $0xc0] sm:$0xff]
    %v85 = vld [vmem:[#allocation5 + $0xc8] sm:$0xff]
    %v86 = vld [vmem:[#allocation5 + $0xd0] sm:$0xff]
    %v87 = vld [vmem:[#allocation5 + $0xd8] sm:$0xff]
    %v88 = vld [vmem:[#allocation5 + $0xe0] sm:$0xff]
    %v89 = vld [vmem:[#allocation5 + $0xe8] sm:$0xff]
    %v90 = vld [vmem:[#allocation5 + $0xf0] sm:$0xff]
    %v91 = vld [vmem:[#allocation5 + $0xf8] sm:$0xff]
    %v92 = vld [vmem:[#allocation5 + $0x100] sm:$0xff]
    %v93 = vld [vmem:[#allocation5 + $0x108] sm:$0xff]
    %v94 = vld [vmem:[#allocation5 + $0x110] sm:$0xff]
    %v95 = vld [vmem:[#allocation5 + $0x118] sm:$0xff]
    %v96 = vld [vmem:[#allocation5 + $0x120] sm:$0xff]
    %v97 = vld [vmem:[#allocation5 + $0x128] sm:$0xff]
    %v98 = vld [vmem:[#allocation5 + $0x130] sm:$0xff]
    %v99 = vld [vmem:[#allocation5 + $0x138] sm:$0xff]
    %v100 = vld [vmem:[#allocation5 + $0x140] sm:$0xff]
    %v101 = vld [vmem:[#allocation5 + $0x148] sm:$0xff]
    %v102 = vld [vmem:[#allocation5 + $0x150] sm:$0xff]
    %v103 = vld [vmem:[#allocation5 + $0x158] sm:$0xff]
    %v104 = vld [vmem:[#allocation5 + $0x160] sm:$0xff]
    %v105 = vld [vmem:[#allocation5 + $0x168] sm:$0xff]
    %v106 = vld [vmem:[#allocation5 + $0x170] sm:$0xff]
    %v107 = vld [vmem:[#allocation5 + $0x178] sm:$0xff]
    %v108 = vld [vmem:[#allocation5 + $0x180] sm:$0xff]
    %v109 = vld [vmem:[#allocation5 + $0x188] sm:$0xff]
    %v110 = vld [vmem:[#allocation5 + $0x190] sm:$0xff]
    %v111 = vld [vmem:[#allocation5 + $0x198] sm:$0xff]
    %v112 = vld [vmem:[#allocation5 + $0x1a0] sm:$0xff]
    %v113 = vld [vmem:[#allocation5 + $0x1a8] sm:$0xff]
    %v114 = vld [vmem:[#allocation5 + $0x1b0] sm:$0xff]
    %v115 = vld [vmem:[#allocation5 + $0x1b8] sm:$0xff]
    %v116 = vld [vmem:[#allocation5 + $0x1c0] sm:$0xff]
    %v117 = vld [vmem:[#allocation5 + $0x1c8] sm:$0xff]
    %v118 = vld [vmem:[#allocation5 + $0x1d0] sm:$0xff]
    %v119 = vld [vmem:[#allocation5 + $0x1d8] sm:$0xff]
    %v120 = vld [vmem:[#allocation5 + $0x1e0] sm:$0xff]
    %v121 = vld [vmem:[#allocation5 + $0x1e8] sm:$0xff]
    %v122 = vld [vmem:[#allocation5 + $0x1f0] sm:$0xff]
    %v123 = vld [vmem:[#allocation5 + $0x1f8] sm:$0xff]
    %v124 = vld [vmem:[#allocation7] sm:$0x3]
    %v126 = vperm.slane %v124, 0
    %v127 = vperm.slane %v124, 1
    %130 = vmatpush.msra.mxu0 %v90
    %131 = vmatpush.msra.mxu0 %v88
    %132 = vmatpush.msra.mxu0 %v86
    %133 = vmatpush.msra.mxu0 %v84
    %134 = vmatpush.msra.mxu0 %v82
    %135 = vmatpush.msra.mxu0 %v80
    %136 = vmatpush.msra.mxu0 %v78
    %137 = vmatpush.msra.mxu0 %v76
    %138 = vmatpush.msra.mxu0 %v74
    %139 = vmatpush.msra.mxu0 %v72
    %140 = vmatpush.msra.mxu0 %v70
    %141 = vmatpush.msra.mxu0 %v68
    %142 = vmatpush.msra.mxu0 %v66
    %143 = vmatpush.msra.mxu0 %v64
    %144 = vmatpush.msra.mxu0 %v62
    %145 = vmatpush.msra.mxu0 %v60
    %146 = vmatmul.f32.gmra.mxu0 %v58
    %v147 = vpop.f32.mrf.mxu0
    %v148 = vadd.f32 %v126, %v147
    %149 = vdwg.mxu0
    %150 = vmatpush.msra.mxu0 %v122
    %151 = vmatpush.msra.mxu0 %v120
    %152 = vmatpush.msra.mxu0 %v118
    %153 = vmatpush.msra.mxu0 %v116
    %154 = vmatpush.msra.mxu0 %v114
    %155 = vmatpush.msra.mxu0 %v112
    %156 = vmatpush.msra.mxu0 %v110
    %157 = vmatpush.msra.mxu0 %v108
    %158 = vmatpush.msra.mxu0 %v106
    %159 = vmatpush.msra.mxu0 %v104
    %160 = vmatpush.msra.mxu0 %v102
    %161 = vmatpush.msra.mxu0 %v100
    %162 = vmatpush.msra.mxu0 %v98
    %163 = vmatpush.msra.mxu0 %v96
    %164 = vmatpush.msra.mxu0 %v94
    %165 = vmatpush.msra.mxu0 %v92
    %166 = vmatmul.f32.gmra.mxu0 %v59
    %v167 = vpop.f32.mrf.mxu0
    %v168 = vadd.f32 %v148, %v167
    %169 = vdwg.mxu0
    %170 = vmatpush.msra.mxu0 %v91
    %171 = vmatpush.msra.mxu0 %v89
    %172 = vmatpush.msra.mxu0 %v87
    %173 = vmatpush.msra.mxu0 %v85
    %174 = vmatpush.msra.mxu0 %v83
    %175 = vmatpush.msra.mxu0 %v81
    %176 = vmatpush.msra.mxu0 %v79
    %177 = vmatpush.msra.mxu0 %v77
    %178 = vmatpush.msra.mxu0 %v75
    %179 = vmatpush.msra.mxu0 %v73
    %180 = vmatpush.msra.mxu0 %v71
    %181 = vmatpush.msra.mxu0 %v69
    %182 = vmatpush.msra.mxu0 %v67
    %183 = vmatpush.msra.mxu0 %v65
    %184 = vmatpush.msra.mxu0 %v63
    %185 = vmatpush.msra.mxu0 %v61
    %186 = vmatmul.f32.gmra.mxu0 %v58
    %v187 = vpop.f32.mrf.mxu0
    %v188 = vadd.f32 %v127, %v187
    %189 = vdwg.mxu0
    %190 = vmatpush.msra.mxu0 %v123
    %191 = vmatpush.msra.mxu0 %v121
    %192 = vmatpush.msra.mxu0 %v119
    %193 = vmatpush.msra.mxu0 %v117
    %194 = vmatpush.msra.mxu0 %v115
    %195 = vmatpush.msra.mxu0 %v113
    %196 = vmatpush.msra.mxu0 %v111
    %197 = vmatpush.msra.mxu0 %v109
    %198 = vmatpush.msra.mxu0 %v107
    %199 = vmatpush.msra.mxu0 %v105
    %200 = vmatpush.msra.mxu0 %v103
    %201 = vmatpush.msra.mxu0 %v101
    %202 = vmatpush.msra.mxu0 %v99
    %203 = vmatpush.msra.mxu0 %v97
    %204 = vmatpush.msra.mxu0 %v95
    %205 = vmatpush.msra.mxu0 %v93
    %206 = vmatmul.f32.gmra.mxu0 %v59
    %v207 = vpop.f32.mrf.mxu0
    %v208 = vadd.f32 %v188, %v207
    %209 = vdwg.mxu0
    %v210 = vsub.f32 0.0, %v208
    %v211 = vmul.f32 %v210, 1.442695
    %v212 = vpow.pop %v211
    %v213 = vadd.f32 %v212, 1.0
    %v214 = vrcp.pop %v213
    %v215 = vmul.f32 %v213, %v214
    %v216 = vsub.f32 1.0, %v215
    %v217 = vmul.f32 %v214, %v216
    %v218 = vadd.f32 %v214, %v217
    %vm219 = vweird.f32 %v213
    %vm220 = vweird.f32 %v214
    %vm221 = vmor %vm219, %vm220
    %v222 = vsel %vm221, %v214, %v218
    %v223 = vand.u32 2147483647, %v213
    %vm224 = vcmp.eq.f32.partialorder %v223, 8.507059e+37
    %v225 = vand.u32 %v213, 2147483648
    %v226 = vor.u32 1.1754944e-38, %v225
    %v227 = vsel %vm224, %v226, %v222
    %v228 = vmul.f32 1.0, %v227
    %v229 = vmul.f32 %v228, %v168
    %vm230 = vcmp.gt.f32.partialorder %v229, 0.0
    %v231 = vmul.f32 %v229, 1.442695
    %v232 = vpow.pop %v231
    %v233 = vsub.f32 %v232, 1.0
    %v234 = vsel %vm230, %v229, %v233
    %235 = vst [vmem:[#allocation8] sm:$0xff] %v234
    // Predicated region
    $region26: #{tpu_custom_call.1} parent=1 // pred_check
      _
    $region27: #{tpu_custom_call.1} parent=1 // pred_check_branch
      %237 = sbr.rel (0) target = $region29
    $region28: #{tpu_custom_call.1} parent=1 // pred_region
      %239 = vsyncadd [#allocation4], 0
      %s241 = sshll.u32 [#allocation8], 4
      %s242 = int_to_ptr.vmem [resolvable:$true] %s241
      %s243 = sshll.u32 %s3, 4
      %s244 = int_to_ptr.hbm [resolvable:$true] %s243
      %246 = dma.vmem_to_hbm [thread:$0]  %s242, 128, %s244, [#allocation4]
    $region29: #{tpu_custom_call.1} parent=1 // pred_fallthru
      _
    // Predicated region
    $region30: #{tpu_custom_call.1} parent=1 // pred_check
      _
    $region31: #{tpu_custom_call.1} parent=1 // pred_check_branch
      %248 = sbr.rel (0) target = $region33
    $region32: #{tpu_custom_call.1} parent=1 // pred_region
      %250 = dma.done [#allocation4], 128
    $region33: #{tpu_custom_call.1} parent=1 // pred_fallthru
      _
    %251 = vsyncpa [#allocation3], 1
    %252 = vsyncpa [#allocation6], 1
    %253 = vsyncpa [#allocation4], 1

</llo_original>
